<compile_context>
chip_gen: v6e
topology: v6e:2x2x1
jax: 0.10.0
libtpu: 0.0.40
codegen_flags: <defaults>
</compile_context>

<pallas_src>
import numpy as np
import jax
import jax.numpy as jnp
from jax.experimental import pallas as pl
from jax.experimental.pallas import tpu as pltpu


BN_EPS = 1e-5
NORM_CLAMP_MIN = 1e-8

LANE = 128
SUBLANE = 8


def _round_up(x, m):
    return ((x + m - 1) // m) * m


def _vmem_limits():
    """Return (vmem_limit_bytes, per-step live-set budget), generation aware."""
    try:
        cap = int(pltpu.get_tpu_info().vmem_capacity_bytes)
    except Exception:
        cap = 64 << 20  # conservative fallback (v7x per-core VMEM)
    # 64 MiB scoped limit on 128-MiB parts (v5e/v6e), 40 MiB on 64-MiB v7x.
    limit = min(64 << 20, (cap * 5) // 8)
    budget = limit // 2  # leave headroom for pipelining / compiler scratch
    return limit, budget


def _choose_tile_n(n, f, in_itemsize, out_itemsize, budget, max_rows):
    """Largest row tile fitting the budget (dtype- and intermediate-aware)."""
    f_vmem = _round_up(f, LANE)  # lane padding in VMEM layout
    # 2x double-buffered input + 2x double-buffered output + 2 f32 intermediates
    bytes_per_row = f_vmem * (2 * in_itemsize + 2 * out_itemsize + 2 * 4)
    rows = int(budget // max(bytes_per_row, 1))
    rows = min(rows, max_rows)
    if rows >= n:
        return n  # single full-batch tile (block dim == full array dim is legal)
    return max(SUBLANE, (rows // SUBLANE) * SUBLANE)


# ---------------------------------------------------------------------------
# Fast path: whole problem resident in VMEM, one launch, exact centered var.
# ---------------------------------------------------------------------------
def _forward_fused_small(x, gamma2, beta2, vmem_limit):
    n, f = x.shape
    inv_n = 1.0 / n

    def kernel(x_ref, g_ref, b_ref, o_ref):
        xf = x_ref[...].astype(jnp.float32)
        mean = jnp.sum(xf, axis=0, keepdims=True) * inv_n
        xc = xf - mean
        var = jnp.sum(xc * xc, axis=0, keepdims=True) * inv_n        # biased var
        scale = g_ref[...] * jax.lax.rsqrt(var + BN_EPS)
        y = xc * scale + b_ref[...]
        sq = jnp.sum(y * y, axis=1, keepdims=True)
        # max(sqrt(s), 1e-8) then divide == multiply by rsqrt(max(s, 1e-16))
        inv_norm = jax.lax.rsqrt(jnp.maximum(sq, NORM_CLAMP_MIN * NORM_CLAMP_MIN))
        o_ref[...] = (y * inv_norm).astype(o_ref.dtype)

    return pl.pallas_call(
        kernel,
        out_shape=jax.ShapeDtypeStruct((n, f), x.dtype),
        compiler_params=pltpu.CompilerParams(vmem_limit_bytes=vmem_limit),
    )(x, gamma2, beta2)


# ---------------------------------------------------------------------------
# Large-batch path: tiled two-pass pipeline, no HBM padding, glue folded in.
# ---------------------------------------------------------------------------
def _forward_two_pass(x, gamma2, beta2, vmem_limit, budget, max_tile_rows):
    n, f = x.shape
    tile_n = _choose_tile_n(n, f, x.dtype.itemsize, x.dtype.itemsize,
                            budget, max_tile_rows)
    grid_n = pl.cdiv(n, tile_n)
    needs_mask = (n % tile_n) != 0
    inv_n = 1.0 / n

    # ---- Pass 1: pivot-shifted per-feature sum / sum-of-squares ----
    def stats_kernel(x_ref, sum_ref, sumsq_ref, pivot_ref):
        i = pl.program_id(0)

        @pl.when(i == 0)
        def _():
            # Pivot = first row of x; shifting by it avoids catastrophic
            # cancellation in E[x^2] - mean^2 for mean-shifted inputs.
            pivot_ref[...] = x_ref[0:1, :].astype(jnp.float32)
            sum_ref[...] = jnp.zeros_like(sum_ref)
            sumsq_ref[...] = jnp.zeros_like(sumsq_ref)

        xc = x_ref[...].astype(jnp.float32) - pivot_ref[...]
        if needs_mask:
            row = jax.lax.broadcasted_iota(jnp.int32, xc.shape, 0) + i * tile_n
            xc = jnp.where(row < n, xc, 0.0)          # mask ragged last tile
        sum_ref[...] += jnp.sum(xc, axis=0, keepdims=True)
        sumsq_ref[...] += jnp.sum(xc * xc, axis=0, keepdims=True)

    small_spec = pl.BlockSpec((1, f), lambda i: (0, 0))
    small_shape = jax.ShapeDtypeStruct((1, f), jnp.float32)

    feat_sum, feat_sumsq, pivot = pl.pallas_call(
        stats_kernel,
        out_shape=(small_shape, small_shape, small_shape),
        grid=(grid_n,),
        in_specs=[pl.BlockSpec((tile_n, f), lambda i: (i, 0))],
        out_specs=(small_spec, small_spec, small_spec),
        compiler_params=pltpu.CompilerParams(
            dimension_semantics=("arbitrary",),
            vmem_limit_bytes=vmem_limit),
    )(x)

    # ---- Pass 2: folded BN scale/bias + row L2 norm (glue fused in-kernel) ----
    def apply_kernel(x_ref, sum_ref, sumsq_ref, pivot_ref, g_ref, b_ref, o_ref):
        d_mean = sum_ref[...] * inv_n                              # mean - pivot
        var = jnp.maximum(sumsq_ref[...] * inv_n - d_mean * d_mean, 0.0)
        scale = g_ref[...] * jax.lax.rsqrt(var + BN_EPS)           # O(F) only
        bias = b_ref[...] - (pivot_ref[...] + d_mean) * scale
        y = x_ref[...].astype(jnp.float32) * scale + bias
        sq = jnp.sum(y * y, axis=1, keepdims=True)                 # XLU lane reduce
        inv_norm = jax.lax.rsqrt(jnp.maximum(sq, NORM_CLAMP_MIN * NORM_CLAMP_MIN))
        o_ref[...] = (y * inv_norm).astype(o_ref.dtype)

    return pl.pallas_call(
        apply_kernel,
        out_shape=jax.ShapeDtypeStruct((n, f), x.dtype),
        grid=(grid_n,),
        in_specs=[pl.BlockSpec((tile_n, f), lambda i: (i, 0)),
                  small_spec, small_spec, small_spec, small_spec, small_spec],
        out_specs=pl.BlockSpec((tile_n, f), lambda i: (i, 0)),
        compiler_params=pltpu.CompilerParams(
            dimension_semantics=("parallel",),
            vmem_limit_bytes=vmem_limit),
    )(x, feat_sum, feat_sumsq, pivot, gamma2, beta2)


def etf_classifier_forward(x, gamma, beta, *, max_tile_rows=1024,
                           force_two_pass=False):
    """x: (N, F); gamma/beta: (F,) BN weight/bias. Returns (N, F) in x.dtype."""
    n, f = x.shape
    gamma2 = jnp.asarray(gamma, jnp.float32).reshape(1, f)
    beta2 = jnp.asarray(beta, jnp.float32).reshape(1, f)
    vmem_limit, budget = _vmem_limits()

    # Fast path if the whole problem (in + out + ~3 f32 intermediates, with
    # VMEM lane/sublane padding) fits comfortably in VMEM.
    f_vmem = _round_up(f, LANE)
    n_vmem = _round_up(n, SUBLANE)
    fast_bytes = n_vmem * f_vmem * (2 * x.dtype.itemsize + 3 * 4)
    if (not force_two_pass) and fast_bytes <= budget:
        return _forward_fused_small(x, gamma2, beta2, vmem_limit)
    return _forward_two_pass(x, gamma2, beta2, vmem_limit, budget, max_tile_rows)


class ETFClassifierJAX:
    """Deterministic-parameter reimplementation of ETF_Classifier (forward only)."""

    def __init__(self, feat_in, num_classes, seed=0):
        self.feat_in = feat_in
        self.num_classes = num_classes

        # ETF projection matrix ori_M (not used in forward, kept for fidelity).
        rng = np.random.RandomState(seed)
        a = rng.random_sample((feat_in, num_classes)).astype(np.float64)
        P, _ = np.linalg.qr(a)
        P = P.astype(np.float32)
        I = np.eye(num_classes, dtype=np.float32)
        one = np.ones((num_classes, num_classes), dtype=np.float32)
        M = np.sqrt(num_classes / (num_classes - 1)) * (P @ (I - one / num_classes))
        self.ori_M = jnp.asarray(M)

        # BatchNorm1d(feat_in) default init: weight = 1, bias = 0.
        self.bn_gamma = jnp.ones((feat_in,), dtype=jnp.float32)
        self.bn_beta = jnp.zeros((feat_in,), dtype=jnp.float32)

    def __call__(self, x):
        return etf_classifier_forward(x, self.bn_gamma, self.bn_beta)


def _reference_forward(x, gamma, beta):
    """Pure-JAX reference of the same semantics (for sanity checking)."""
    x = x.astype(jnp.float32)
    mean = jnp.mean(x, axis=0, keepdims=True)
    var = jnp.mean((x - mean) ** 2, axis=0, keepdims=True)
    y = (x - mean) / jnp.sqrt(var + BN_EPS) * gamma[None, :] + beta[None, :]
    norm = jnp.maximum(jnp.sqrt(jnp.sum(y * y, axis=1, keepdims=True)), NORM_CLAMP_MIN)
    return y / norm


if __name__ == "__main__":
    # Small shapes consistent with the module: x is (batch, feat_in).
    batch, feat_in, num_classes = 8, 32, 16
    k1, k2, k3, k4 = jax.random.split(jax.random.PRNGKey(0), 4)

    # --- Test 1: fast (single-launch fused) path ---
    x = jax.random.normal(k1, (batch, feat_in), dtype=jnp.float32) * 2.0 + 3.0
    model = ETFClassifierJAX(feat_in, num_classes, seed=0)
    out = jax.block_until_ready(model(x))
    ref = _reference_forward(x, model.bn_gamma, model.bn_beta)
    np.testing.assert_allclose(np.asarray(out), np.asarray(ref), rtol=1e-4, atol=1e-5)
    row_norms = np.linalg.norm(np.asarray(out), axis=1)
    assert np.allclose(row_norms, 1.0, atol=1e-4), row_norms

    # --- Test 2: tiled two-pass path (ragged batch tiles, F not a multiple of
    #     128, non-trivial gamma/beta), forced at a small size ---
    n2, f2 = 300, 200
    x2 = jax.random.normal(k2, (n2, f2), dtype=jnp.float32) * 1.5 + 4.0
    g2 = 1.0 + 0.1 * jax.random.normal(k3, (f2,), dtype=jnp.float32)
    b2 = 0.1 * jax.random.normal(k4, (f2,), dtype=jnp.float32)
    out2 = jax.block_until_ready(
        etf_classifier_forward(x2, g2, b2, max_tile_rows=128, force_two_pass=True))
    ref2 = _reference_forward(x2, g2, b2)
    np.testing.assert_allclose(np.asarray(out2), np.asarray(ref2), rtol=1e-4, atol=1e-5)

    print("KERNEL_OK")
</pallas_src>

<mosaic_0001>
module attributes {stable_mosaic.version = 11 : i64} {
  func.func @kernel(%arg0: memref<8x32xf32, #tpu.memory_space<vmem>>, %arg1: memref<1x32xf32, #tpu.memory_space<vmem>>, %arg2: memref<1x32xf32, #tpu.memory_space<vmem>>, %arg3: memref<8x32xf32, #tpu.memory_space<vmem>>) attributes {dimension_semantics = [], scalar_prefetch = 0 : i64, scratch_operands = 0 : i64, tpu.core_type = #tpu.core_type<tc>} {
    %c0 = arith.constant 0 : index
    %c0_0 = arith.constant 0 : index
    %0 = vector.load %arg0[%c0, %c0_0] : memref<8x32xf32, #tpu.memory_space<vmem>>, vector<8x32xf32>
    %cst = arith.constant dense<0.000000e+00> : vector<32xf32>
    %1 = vector.multi_reduction <add>, %0, %cst [0] : vector<8x32xf32> to vector<32xf32>
    %2 = vector.shape_cast %1 : vector<32xf32> to vector<1x32xf32>
    %cst_1 = arith.constant 1.250000e-01 : f32
    %3 = vector.broadcast %cst_1 : f32 to vector<1x32xf32>
    %4 = arith.mulf %2, %3 : vector<1x32xf32>
    %5 = vector.broadcast %4 : vector<1x32xf32> to vector<8x32xf32>
    %6 = arith.subf %0, %5 : vector<8x32xf32>
    %7 = arith.mulf %6, %6 : vector<8x32xf32>
    %cst_2 = arith.constant dense<0.000000e+00> : vector<32xf32>
    %8 = vector.multi_reduction <add>, %7, %cst_2 [0] : vector<8x32xf32> to vector<32xf32>
    %9 = vector.shape_cast %8 : vector<32xf32> to vector<1x32xf32>
    %cst_3 = arith.constant 1.250000e-01 : f32
    %10 = vector.broadcast %cst_3 : f32 to vector<1x32xf32>
    %11 = arith.mulf %9, %10 : vector<1x32xf32>
    %c0_4 = arith.constant 0 : index
    %c0_5 = arith.constant 0 : index
    %12 = vector.load %arg1[%c0_4, %c0_5] : memref<1x32xf32, #tpu.memory_space<vmem>>, vector<1x32xf32>
    %cst_6 = arith.constant 9.99999974E-6 : f32
    %13 = vector.broadcast %cst_6 : f32 to vector<1x32xf32>
    %14 = arith.addf %11, %13 : vector<1x32xf32>
    %15 = math.rsqrt %14 : vector<1x32xf32>
    %16 = arith.mulf %12, %15 : vector<1x32xf32>
    %17 = vector.broadcast %16 : vector<1x32xf32> to vector<8x32xf32>
    %18 = arith.mulf %6, %17 : vector<8x32xf32>
    %c0_7 = arith.constant 0 : index
    %c0_8 = arith.constant 0 : index
    %19 = vector.load %arg2[%c0_7, %c0_8] : memref<1x32xf32, #tpu.memory_space<vmem>>, vector<1x32xf32>
    %20 = vector.broadcast %19 : vector<1x32xf32> to vector<8x32xf32>
    %21 = arith.addf %18, %20 : vector<8x32xf32>
    %22 = arith.mulf %21, %21 : vector<8x32xf32>
    %cst_9 = arith.constant dense<0.000000e+00> : vector<8xf32>
    %23 = vector.multi_reduction <add>, %22, %cst_9 [1] : vector<8x32xf32> to vector<8xf32>
    %24 = vector.shape_cast %23 : vector<8xf32> to vector<8x1xf32>
    %cst_10 = arith.constant 1.000000e-16 : f32
    %25 = vector.broadcast %cst_10 : f32 to vector<8x1xf32>
    %26 = arith.maximumf %24, %25 : vector<8x1xf32>
    %27 = math.rsqrt %26 : vector<8x1xf32>
    %28 = vector.broadcast %27 : vector<8x1xf32> to vector<8x32xf32>
    %29 = arith.mulf %21, %28 : vector<8x32xf32>
    %c0_11 = arith.constant 0 : index
    %c0_12 = arith.constant 0 : index
    %30 = vector.load %arg3[%c0_11, %c0_12] : memref<8x32xf32, #tpu.memory_space<vmem>>, vector<8x32xf32>
    tpu.vector_store %arg3[%c0_11, %c0_12], %29 {strides = array<i32>} : memref<8x32xf32, #tpu.memory_space<vmem>>, vector<8x32xf32>,
    return
  }
}

</mosaic_0001>

<llo_original>
// kernel: tpu_custom_call.1
$region0: #{tpu_custom_call.1}
  #allocation0 [shape = 'u32[]', space=smem, size = 0x4, offset = 0x4, fixed_abs, tag = 'smem constant byte address 0x4 - core index']
  #allocation1 [shape = 'u32[144,128]{1,0:T(1,128)}', space=vmem, size = 0x12000, scoped, tag = 'internal scratch']
  %s0 = inlined_call_operand.hbm [shape: f32[8,32], index: 0, kind: input, shape index: {}]
  %s1 = inlined_call_operand.vmem [shape: f32[1,32], index: 1, kind: input, shape index: {}]
  %s2 = inlined_call_operand.vmem [shape: f32[1,32], index: 2, kind: input, shape index: {}]
  %s3 = inlined_call_operand.hbm [shape: f32[8,32], index: 3, kind: output, shape index: {}]
  %s4 = sld [smem:[#allocation0]]
  $region26: #{tpu_custom_call.1} parent=0
    _
  %s6 = ssub.s32 1, %s4
  %s7 = scalar_select 0, %s6, %s4
  $region1: #{tpu_custom_call.1} parent=0
    #allocation2 [shape = 'u8[4096]{0}', space=vmem, size = 0x1000, scoped, tag = 'input window, operand 0, single buffered']
    #allocation3 [shape = 's32[1]{0}', space=sflag, size = 0x4, scoped, tag = 'scoped memory for tpu_custom_call.1']
    #allocation4 [shape = 's32[1]{0}', space=sflag, size = 0x4, scoped, tag = 'scoped memory for tpu_custom_call.1']
    #allocation5 [shape = 'u8[4096]{0}', space=vmem, size = 0x1000, scoped, tag = 'output window, operand 0, single buffered']
    %8 = vsyncpa [#allocation3], 0
    %9 = vsyncpa [#allocation4], 0
    // Predicated region
    $region2: #{tpu_custom_call.1} parent=1 // pred_check
      _
    $region3: #{tpu_custom_call.1} parent=1 // pred_check_branch
      %11 = sbr.rel (0) target = $region5
    $region4: #{tpu_custom_call.1} parent=1 // pred_region
      %s13 = ssub.s32 128, 128
      %14 = vsyncadd [#allocation3], %s13
      %s16 = sshll.u32 [#allocation2], 4
      %s17 = int_to_ptr.vmem [resolvable:$true] %s16
      %19 = dma.hbm_to_vmem [thread:$0]  %s0, 128, %s17, [#allocation3]
    $region5: #{tpu_custom_call.1} parent=1 // pred_fallthru
      _
    // Predicated region
    $region6: #{tpu_custom_call.1} parent=1 // pred_check
      _
    $region7: #{tpu_custom_call.1} parent=1 // pred_check_branch
      %21 = sbr.rel (0) target = $region9
    $region8: #{tpu_custom_call.1} parent=1 // pred_region
      _
    $region9: #{tpu_custom_call.1} parent=1 // pred_fallthru
      _
    // Predicated region
    $region10: #{tpu_custom_call.1} parent=1 // pred_check
      _
    $region11: #{tpu_custom_call.1} parent=1 // pred_check_branch
      %23 = sbr.rel (0) target = $region13
    $region12: #{tpu_custom_call.1} parent=1 // pred_region
      _
    $region13: #{tpu_custom_call.1} parent=1 // pred_fallthru
      _
    // Predicated region
    $region14: #{tpu_custom_call.1} parent=1 // pred_check
      _
    $region15: #{tpu_custom_call.1} parent=1 // pred_check_branch
      %25 = sbr.rel (0) target = $region17
    $region16: #{tpu_custom_call.1} parent=1 // pred_region
      %26 = dma.done [#allocation3], 128
    $region17: #{tpu_custom_call.1} parent=1 // pred_fallthru
      _
    %v27 = vld [vmem:[#allocation2] sm:$0xff]
    %vm28 = vcmask 261120
    %v29 = vsel %vm28, %v27, 0.0
    %v30 = vrot.slane %v29, 4
    %v31 = vadd.f32 %v29, %v30
    %v32 = vrot.slane %v31, 2
    %v33 = vadd.f32 %v31, %v32
    %v34 = vrot.slane %v33, 1
    %v35 = vadd.f32 %v33, %v34
    %v36 = vmul.f32 %v35, 0.125
    %v37 = vsub.f32 %v27, %v36
    %v38 = vmul.f32 %v37, %v37
    %v39 = vsel %vm28, %v38, 0.0
    %v40 = vrot.slane %v39, 4
    %v41 = vadd.f32 %v39, %v40
    %v42 = vrot.slane %v41, 2
    %v43 = vadd.f32 %v41, %v42
    %v44 = vrot.slane %v43, 1
    %v45 = vadd.f32 %v43, %v44
    %v46 = vmul.f32 %v45, 0.125
    %v47 = vld [vmem:[%s1] sm:$0x1]
    %v48 = vadd.f32 %v46, 1e-05
    %v49 = vrsqrt.pop %v48
    %v50 = vmul.f32 %v47, %v49
    %v52 = vlaneseq
    %v53 = vshrl.u32 %v52, 7
    %v54 = vsub.s32 0, %v53
    %v55 = vrot.slane %v50, %v54
    %v57 = vmul.f32 %v37, %v55
    %v58 = vld [vmem:[%s2] sm:$0x1]
    %v60 = vlaneseq
    %v61 = vshrl.u32 %v60, 7
    %v62 = vsub.s32 0, %v61
    %v63 = vrot.slane %v58, %v62
    %v65 = vadd.f32 %v57, %v63
    %v66 = vmul.f32 %v65, %v65
    %v67 = vsel %vm28, %v66, 0.0
    %68 = vadd.xlane.f32.xlu0 %v67
    %v69 = vpop.xlane.xlu0 %68
    %v70 = vmax.f32 %v69, 1e-16
    %v71 = vrsqrt.pop %v70
    %v72 = vmul.f32 %v65, %v71
    %73 = vst.msk [vmem:[#allocation5] sm:$0xff] %vm28, %v72
    // Predicated region
    $region18: #{tpu_custom_call.1} parent=1 // pred_check
      _
    $region19: #{tpu_custom_call.1} parent=1 // pred_check_branch
      %75 = sbr.rel (0) target = $region21
    $region20: #{tpu_custom_call.1} parent=1 // pred_region
      %s77 = ssub.s32 128, 128
      %78 = vsyncadd [#allocation4], %s77
      %s80 = sshll.u32 [#allocation5], 4
      %s81 = int_to_ptr.vmem [resolvable:$true] %s80
      %83 = dma.vmem_to_hbm [thread:$0]  %s81, 128, %s3, [#allocation4]
    $region21: #{tpu_custom_call.1} parent=1 // pred_fallthru
      _
    // Predicated region
    $region22: #{tpu_custom_call.1} parent=1 // pred_check
      _
    $region23: #{tpu_custom_call.1} parent=1 // pred_check_branch
      %85 = sbr.rel (0) target = $region25
    $region24: #{tpu_custom_call.1} parent=1 // pred_region
      %86 = dma.done [#allocation4], 128
    $region25: #{tpu_custom_call.1} parent=1 // pred_fallthru
      _
    %87 = vsyncpa [#allocation3], 1
    %88 = vsyncpa [#allocation4], 1

</llo_original>
